<compile_context>
chip_gen: v5e
topology: v5e:2x2
jax: 0.10.0
libtpu: 0.0.40
codegen_flags: <defaults>
</compile_context>

<pallas_src>
import functools

import jax
import jax.numpy as jnp
from jax.experimental import pallas as pl
from jax.experimental.pallas import tpu as pltpu

LN_EPS = 1e-5

_TM = 256          # target row tile (multiple of 8)
_TN = 256          # target output-feature tile (multiple of 128, matches MXU)

_MIB = 1024 * 1024
_VMEM_BUDGET = 44 * _MIB   # keep resident tiles under this (v7x has 64 MiB/TC)
_VMEM_CLAMP = 56 * _MIB    # never request more scoped VMEM than this


# ----------------------------- helpers ------------------------------------- #
def _round_up(n, m):
    return (n + m - 1) // m * m


def _choose_tile(n, target, mult):
    """Tile = min(target, round_up(n, mult)); pad n up to a multiple of the
    tile (full-occupancy tiles; padding is bounded by one tile)."""
    n_r = _round_up(n, mult)
    t = min(_round_up(target, mult), n_r)
    n_p = _round_up(n_r, t)
    return t, n_p


def _pad_to(a, shape):
    pads = [(0, s - d) for d, s in zip(a.shape, shape)]
    if any(p for _, p in pads):
        a = jnp.pad(a, pads)
    return a


def _vmem_limit(need):
    return int(min(max(2 * need, 32 * _MIB), _VMEM_CLAMP))


def _fit_rows(tm, need_fn):
    """Halve the row tile (multiple of 8) until the tile set fits the budget."""
    while tm > 8 and need_fn(tm) > _VMEM_BUDGET:
        tm = max(8, _round_up(tm // 2, 8))
    return tm


# ----------------------------- kernels ------------------------------------- #
def _residual_plain_kernel(xb_ref, xres_ref, wf_ref, bf_ref, o_ref):
    # out[i, j-tile] = (x @ wf[:, j-tile] + bf[j-tile]) + x[i, j-tile]
    fn_t = jnp.dot(xb_ref[...], wf_ref[...],
                   preferred_element_type=jnp.float32) + bf_ref[...]
    o_ref[...] = (fn_t + xres_ref[...].astype(jnp.float32)).astype(o_ref.dtype)


def _residual_downsample_kernel(inv_d2, xb_ref, wf_ref, bf_ref, wd_ref, bd_ref,
                                g_ref, beta_ref, o_ref,
                                fn_scr, h_scr, sum_scr, sq_scr):
    # out = (x @ wf + bf) + LayerNorm(x @ wd + bd)
    # Grid axis 1 tiles the output-feature dim.  The output block (tm, Np),
    # the f32 fn/h scratches and the (tm,1) LN stat accumulators stay resident
    # across j; LN only normalizes + adds in the last-j step.
    j = pl.program_id(1)
    nj = pl.num_programs(1)
    tn = wf_ref.shape[-1]
    col = pl.multiple_of(j * tn, tn)

    @pl.when(j == 0)
    def _():
        sum_scr[...] = jnp.zeros_like(sum_scr)
        sq_scr[...] = jnp.zeros_like(sq_scr)

    x = xb_ref[...]
    fn_t = jnp.dot(x, wf_ref[...], preferred_element_type=jnp.float32) + bf_ref[...]
    h_t = jnp.dot(x, wd_ref[...], preferred_element_type=jnp.float32) + bd_ref[...]

    # Partial LN statistics per j-tile (co-issues on VPU/XLU under the MXU).
    sum_scr[...] += jnp.sum(h_t, axis=-1, keepdims=True)
    sq_scr[...] += jnp.sum(h_t * h_t, axis=-1, keepdims=True)

    fn_scr[:, pl.ds(col, tn)] = fn_t
    h_scr[:, pl.ds(col, tn)] = h_t

    @pl.when(j == nj - 1)
    def _():
        inv = jnp.float32(inv_d2)          # padded lanes are zero: sums are ok
        mean = sum_scr[...] * inv
        ex2 = sq_scr[...] * inv
        var = jnp.maximum(ex2 - mean * mean, 0.0)
        rstd = jax.lax.rsqrt(var + LN_EPS)
        ln = (h_scr[...] - mean) * rstd * g_ref[...] + beta_ref[...]
        o_ref[...] = (fn_scr[...] + ln).astype(o_ref.dtype)


# ----------------------------- wrappers ------------------------------------ #
def residual_plain(x2d, wf, bf, *, tm=_TM, tn=_TN, compute_dtype=jnp.bfloat16):
    """out = (x @ wf + bf) + x.   x2d: (M, D), wf: (D, D), bf: (D,)."""
    M, D = x2d.shape
    tn, Np = _choose_tile(D, tn, 128)     # output width == input width
    Dp = _round_up(D, 128)

    xisz = jnp.dtype(x2d.dtype).itemsize
    cisz = jnp.dtype(compute_dtype).itemsize
    oisz = xisz

    def need(t):
        return (2 * t * Dp * cisz        # xb (compute dtype), double-buffered
                + 2 * t * tn * xisz      # x residual tile, double-buffered
                + 2 * Dp * tn * cisz     # wf tile, double-buffered
                + 2 * tn * 4             # bias tile
                + 2 * t * tn * oisz)     # out tile, double-buffered

    tm = min(_round_up(tm, 8), _round_up(M, 8))
    tm = _fit_rows(tm, need)
    Mp = _round_up(M, tm)

    xb = _pad_to(x2d.astype(compute_dtype), (Mp, Dp))
    xres = _pad_to(x2d, (Mp, Np))
    wfp = _pad_to(wf.astype(compute_dtype), (Dp, Np))
    bfp = _pad_to(bf.astype(jnp.float32).reshape(1, D), (1, Np))

    cost = pl.CostEstimate(
        flops=2 * Mp * Dp * Np + 2 * Mp * Np,
        transcendentals=0,
        bytes_accessed=int(Mp * Dp * cisz + Mp * Np * xisz + Dp * Np * cisz
                           + Np * 4 + Mp * Np * oisz))

    out = pl.pallas_call(
        _residual_plain_kernel,
        out_shape=jax.ShapeDtypeStruct((Mp, Np), x2d.dtype),
        grid_spec=pltpu.PrefetchScalarGridSpec(
            num_scalar_prefetch=0,
            grid=(Mp // tm, Np // tn),
            in_specs=[
                pl.BlockSpec((tm, Dp), lambda i, j: (i, 0)),   # x (compute dt)
                pl.BlockSpec((tm, tn), lambda i, j: (i, j)),   # x residual
                pl.BlockSpec((Dp, tn), lambda i, j: (0, j)),   # wf tile
                pl.BlockSpec((1, tn), lambda i, j: (0, j)),    # bf tile
            ],
            out_specs=pl.BlockSpec((tm, tn), lambda i, j: (i, j)),
        ),
        compiler_params=pltpu.CompilerParams(
            dimension_semantics=("parallel", "parallel"),
            vmem_limit_bytes=_vmem_limit(need(tm))),
        cost_estimate=cost,
    )(xb, xres, wfp, bfp)
    return out[:M, :D]


def residual_downsample(x2d, wf, bf, wd, bd, gamma, beta, *,
                        tm=_TM, tn=_TN, compute_dtype=jnp.bfloat16):
    """out = (x @ wf + bf) + LayerNorm(x @ wd + bd).
    x2d: (M, D), wf/wd: (D, D2), bf/bd/gamma/beta: (D2,)."""
    M, D = x2d.shape
    D2 = wf.shape[1]
    tn, Np = _choose_tile(D2, tn, 128)
    Dp = _round_up(D, 128)

    xisz = jnp.dtype(x2d.dtype).itemsize
    cisz = jnp.dtype(compute_dtype).itemsize
    oisz = xisz

    def need(t):
        return (2 * t * Dp * cisz            # xb, double-buffered
                + 2 * 2 * Dp * tn * cisz     # wf + wd tiles, double-buffered
                + 4 * 2 * tn * 4             # bf/bd tiles
                + 2 * 2 * Np * 4             # gamma / beta
                + 2 * t * Np * oisz          # out block, pipelined over i
                + t * Np * 4                 # fn scratch (f32)
                + t * Np * 4                 # h scratch (f32)
                + 4 * t * 4)                 # LN stat accumulators

    tm = min(_round_up(tm, 8), _round_up(M, 8))
    tm = _fit_rows(tm, need)
    Mp = _round_up(M, tm)

    xb = _pad_to(x2d.astype(compute_dtype), (Mp, Dp))
    wfp = _pad_to(wf.astype(compute_dtype), (Dp, Np))
    wdp = _pad_to(wd.astype(compute_dtype), (Dp, Np))
    bfp = _pad_to(bf.astype(jnp.float32).reshape(1, D2), (1, Np))
    bdp = _pad_to(bd.astype(jnp.float32).reshape(1, D2), (1, Np))
    gp = _pad_to(gamma.astype(jnp.float32).reshape(1, D2), (1, Np))
    betap = _pad_to(beta.astype(jnp.float32).reshape(1, D2), (1, Np))

    cost = pl.CostEstimate(
        flops=4 * Mp * Dp * Np + 10 * Mp * Np,
        transcendentals=Mp,
        bytes_accessed=int(Mp * Dp * cisz + 2 * Dp * Np * cisz
                           + 4 * Np * 4 + Mp * Np * oisz))

    kern = functools.partial(_residual_downsample_kernel, 1.0 / float(D2))
    out = pl.pallas_call(
        kern,
        out_shape=jax.ShapeDtypeStruct((Mp, Np), x2d.dtype),
        grid_spec=pltpu.PrefetchScalarGridSpec(
            num_scalar_prefetch=0,
            grid=(Mp // tm, Np // tn),
            in_specs=[
                pl.BlockSpec((tm, Dp), lambda i, j: (i, 0)),   # x (resident over j)
                pl.BlockSpec((Dp, tn), lambda i, j: (0, j)),   # wf tile
                pl.BlockSpec((1, tn), lambda i, j: (0, j)),    # bf tile
                pl.BlockSpec((Dp, tn), lambda i, j: (0, j)),   # wd tile
                pl.BlockSpec((1, tn), lambda i, j: (0, j)),    # bd tile
                pl.BlockSpec((1, Np), lambda i, j: (0, 0)),    # gamma (tiny)
                pl.BlockSpec((1, Np), lambda i, j: (0, 0)),    # beta  (tiny)
            ],
            out_specs=pl.BlockSpec((tm, Np), lambda i, j: (i, 0)),
            scratch_shapes=[pltpu.VMEM((tm, Np), jnp.float32),   # fn branch
                            pltpu.VMEM((tm, Np), jnp.float32),   # h = x@wd+bd
                            pltpu.VMEM((tm, 1), jnp.float32),    # sum(h)
                            pltpu.VMEM((tm, 1), jnp.float32)],   # sum(h^2)
        ),
        compiler_params=pltpu.CompilerParams(
            dimension_semantics=("parallel", "arbitrary"),
            vmem_limit_bytes=_vmem_limit(need(tm))),
        cost_estimate=cost,
    )(xb, wfp, bfp, wdp, bdp, gp, betap)
    return out[:M, :D2]


# ----------------------------- references ---------------------------------- #
def _q(a, dt):
    return a.astype(dt).astype(jnp.float32)


def _ref_plain(x2d, wf, bf, cdt=jnp.float32):
    return _q(x2d, cdt) @ _q(wf, cdt) + bf + x2d


def _ref_downsample(x2d, wf, bf, wd, bd, gamma, beta, cdt=jnp.float32):
    xq = _q(x2d, cdt)
    fn_out = xq @ _q(wf, cdt) + bf
    h = xq @ _q(wd, cdt) + bd
    mean = h.mean(-1, keepdims=True)
    var = ((h - mean) ** 2).mean(-1, keepdims=True)
    ln = (h - mean) / jnp.sqrt(var + LN_EPS) * gamma + beta
    return fn_out + ln


def _make_params(key, d_in, d_out):
    k1, k2, k3, k4 = jax.random.split(key, 4)
    wf = jax.random.normal(k1, (d_in, d_out), jnp.float32) * 0.05
    bf = jax.random.normal(k2, (d_out,), jnp.float32) * 0.05
    wd = jax.random.normal(k3, (d_in, d_out), jnp.float32) * 0.05
    bd = jax.random.normal(k4, (d_out,), jnp.float32) * 0.05
    gamma = jnp.ones((d_out,), jnp.float32)   # nn.LayerNorm default init
    beta = jnp.zeros((d_out,), jnp.float32)
    return wf, bf, wd, bd, gamma, beta


# ----------------------------- main ----------------------------------------- #
if __name__ == "__main__":
    key = jax.random.PRNGKey(0)

    # ---- case A: original tiny shape (D=32), f32 compute (accuracy path) ----
    B, T, D = 2, 8, 32
    kx, kp = jax.random.split(key)
    x = jax.random.normal(kx, (B, T, D), jnp.float32)
    x2d = x.reshape(B * T, D)

    wf_p, bf_p, _, _, _, _ = _make_params(kp, D, D)
    out_plain = residual_plain(x2d, wf_p, bf_p, compute_dtype=jnp.float32)
    jax.block_until_ready(out_plain)
    assert jnp.allclose(out_plain, _ref_plain(x2d, wf_p, bf_p),
                        atol=1e-4, rtol=1e-4)

    wf_d, bf_d, wd, bd, gamma, beta = _make_params(kp, D, 2 * D)
    out_ds = residual_downsample(x2d, wf_d, bf_d, wd, bd, gamma, beta,
                                 compute_dtype=jnp.float32)
    jax.block_until_ready(out_ds)
    assert jnp.allclose(out_ds,
                        _ref_downsample(x2d, wf_d, bf_d, wd, bd, gamma, beta),
                        atol=1e-4, rtol=1e-4)

    # ---- case B: multi-tile grids (i and j) with bf16 MXU operands ----
    key2 = jax.random.PRNGKey(1)
    kx2, kp2, kx3, kp3 = jax.random.split(key2, 4)

    M2, D2_in = 24, 320                       # plain: Np=512, tn=256 -> 2 j-tiles
    xb = jax.random.normal(kx2, (M2, D2_in), jnp.float32)
    wf2, bf2, _, _, _, _ = _make_params(kp2, D2_in, D2_in)
    o2 = residual_plain(xb, wf2, bf2, tm=8)   # tm=8 -> 3 i-tiles
    jax.block_until_ready(o2)
    assert jnp.allclose(o2, _ref_plain(xb, wf2, bf2, cdt=jnp.bfloat16),
                        atol=1e-3, rtol=1e-3)

    M3, D3 = 24, 160                          # downsample: 2D=320 -> 2 j-tiles
    xc = jax.random.normal(kx3, (M3, D3), jnp.float32)
    wf3, bf3, wd3, bd3, g3, b3 = _make_params(kp3, D3, 2 * D3)
    o3 = residual_downsample(xc, wf3, bf3, wd3, bd3, g3, b3, tm=8)
    jax.block_until_ready(o3)
    assert jnp.allclose(o3,
                        _ref_downsample(xc, wf3, bf3, wd3, bd3, g3, b3,
                                        cdt=jnp.bfloat16),
                        atol=1e-3, rtol=1e-3)

    print("KERNEL_OK")
</pallas_src>

<mosaic_0001>
module attributes {stable_mosaic.version = 11 : i64} {
  func.func @_residual_plain_kernel(%arg0: i32, %arg1: i32, %arg2: memref<16x128xf32, #tpu.memory_space<vmem>>, %arg3: memref<16x128xf32, #tpu.memory_space<vmem>>, %arg4: memref<128x128xf32, #tpu.memory_space<vmem>>, %arg5: memref<1x128xf32, #tpu.memory_space<vmem>>, %arg6: memref<16x128xf32, #tpu.memory_space<vmem>>) attributes {dimension_semantics = [#tpu.dimension_semantics<parallel>, #tpu.dimension_semantics<parallel>], iteration_bounds = array<i64: 1, 1>, scalar_prefetch = 0 : i64, scratch_operands = 0 : i64, tpu.core_type = #tpu.core_type<tc>, window_params = [{transform_indices = @transform_0, window_bounds = array<i64: 16, 128>}, {transform_indices = @transform_1, window_bounds = array<i64: 16, 128>}, {transform_indices = @transform_2, window_bounds = array<i64: 128, 128>}, {transform_indices = @transform_3, window_bounds = array<i64: 1, 128>}, {transform_indices = @transform_4, window_bounds = array<i64: 16, 128>}]} {
    %c0 = arith.constant 0 : index
    %c0_0 = arith.constant 0 : index
    %0 = vector.load %arg2[%c0, %c0_0] : memref<16x128xf32, #tpu.memory_space<vmem>>, vector<16x128xf32>
    %c0_1 = arith.constant 0 : index
    %c0_2 = arith.constant 0 : index
    %1 = vector.load %arg4[%c0_1, %c0_2] : memref<128x128xf32, #tpu.memory_space<vmem>>, vector<128x128xf32>
    %cst = arith.constant dense<0.000000e+00> : vector<16x128xf32>
    %2 = tpu.matmul %0, %1, %cst {dimension_numbers = #tpu.dot_dimension_numbers<[1], [0], [0], [1], [0, 0, 1, 1], [], []>} : vector<16x128xf32>, vector<128x128xf32>, vector<16x128xf32> -> vector<16x128xf32>
    %c0_3 = arith.constant 0 : index
    %c0_4 = arith.constant 0 : index
    %3 = vector.load %arg5[%c0_3, %c0_4] : memref<1x128xf32, #tpu.memory_space<vmem>>, vector<1x128xf32>
    %4 = vector.broadcast %3 : vector<1x128xf32> to vector<16x128xf32>
    %5 = arith.addf %2, %4 : vector<16x128xf32>
    %c0_5 = arith.constant 0 : index
    %c0_6 = arith.constant 0 : index
    %6 = vector.load %arg3[%c0_5, %c0_6] : memref<16x128xf32, #tpu.memory_space<vmem>>, vector<16x128xf32>
    %7 = arith.addf %5, %6 : vector<16x128xf32>
    %c0_7 = arith.constant 0 : index
    %c0_8 = arith.constant 0 : index
    %8 = vector.load %arg6[%c0_7, %c0_8] : memref<16x128xf32, #tpu.memory_space<vmem>>, vector<16x128xf32>
    tpu.vector_store %arg6[%c0_7, %c0_8], %7 {strides = array<i32>} : memref<16x128xf32, #tpu.memory_space<vmem>>, vector<16x128xf32>,
    return
  }
  func.func @transform_0(%arg0: i32, %arg1: i32) -> (i32, i32) {
    %c0_i32 = arith.constant 0 : i32
    %c0_i32_0 = arith.constant 0 : i32
    return %arg0, %c0_i32 : i32, i32
  }
  func.func @transform_1(%arg0: i32, %arg1: i32) -> (i32, i32) {
    %c0_i32 = arith.constant 0 : i32
    return %arg0, %arg1 : i32, i32
  }
  func.func @transform_2(%arg0: i32, %arg1: i32) -> (i32, i32) {
    %c0_i32 = arith.constant 0 : i32
    %c0_i32_0 = arith.constant 0 : i32
    return %c0_i32, %arg1 : i32, i32
  }
  func.func @transform_3(%arg0: i32, %arg1: i32) -> (i32, i32) {
    %c0_i32 = arith.constant 0 : i32
    %c0_i32_0 = arith.constant 0 : i32
    return %c0_i32, %arg1 : i32, i32
  }
  func.func @transform_4(%arg0: i32, %arg1: i32) -> (i32, i32) {
    %c0_i32 = arith.constant 0 : i32
    return %arg0, %arg1 : i32, i32
  }
}

</mosaic_0001>

<llo_original>
// kernel: tpu_custom_call.1
$region0: #{tpu_custom_call.1}
  #allocation0 [shape = 'u32[]', space=smem, size = 0x4, offset = 0x4, fixed_abs, tag = 'smem constant byte address 0x4 - core index']
  #allocation1 [shape = 'u32[72,128]{1,0:T(1,128)}', space=vmem, size = 0x9000, scoped, tag = 'internal scratch']
  %s0 = inlined_call_operand.hbm [shape: f32[16,128], index: 0, kind: input, shape index: {}]
  %s1 = inlined_call_operand.hbm [shape: f32[16,128], index: 1, kind: input, shape index: {}]
  %s2 = inlined_call_operand.hbm [shape: f32[128,128], index: 2, kind: input, shape index: {}]
  %s3 = inlined_call_operand.vmem [shape: f32[1,128], index: 3, kind: input, shape index: {}]
  %s4 = inlined_call_operand.hbm [shape: f32[16,128], index: 4, kind: output, shape index: {}]
  %s5 = sld [smem:[#allocation0]]
  $region38: #{tpu_custom_call.1} parent=0
    _
  %s7 = ssub.s32 1, %s5
  %s8 = scalar_select 0, %s7, %s5
  $region1: #{tpu_custom_call.1} parent=0
    #allocation2 [shape = 'u8[8192]{0}', space=vmem, size = 0x2000, scoped, tag = 'input window, operand 0, single buffered']
    #allocation3 [shape = 's32[1]{0}', space=sflag, size = 0x4, scoped, tag = 'scoped memory for tpu_custom_call.1']
    #allocation4 [shape = 's32[1]{0}', space=sflag, size = 0x4, scoped, tag = 'scoped memory for tpu_custom_call.1']
    #allocation5 [shape = 'u8[8192]{0}', space=vmem, size = 0x2000, scoped, tag = 'input window, operand 1, single buffered']
    #allocation6 [shape = 's32[1]{0}', space=sflag, size = 0x4, scoped, tag = 'scoped memory for tpu_custom_call.1']
    #allocation7 [shape = 'u8[65536]{0}', space=vmem, size = 0x10000, scoped, tag = 'input window, operand 2, single buffered']
    #allocation8 [shape = 'u8[8192]{0}', space=vmem, size = 0x2000, scoped, tag = 'output window, operand 0, single buffered']
    %9 = vsyncpa [#allocation3], 0
    %10 = vsyncpa [#allocation6], 0
    %11 = vsyncpa [#allocation4], 0
    // Predicated region
    $region2: #{tpu_custom_call.1} parent=1 // pred_check
      _
    $region3: #{tpu_custom_call.1} parent=1 // pred_check_branch
      %13 = sbr.rel (0) target = $region5
    $region4: #{tpu_custom_call.1} parent=1 // pred_region
      %15 = vsyncadd [#allocation3], 0
      %s16 = sshll.u32 %s0, 4
      %s17 = int_to_ptr.hbm [resolvable:$true] %s16
      %s18 = sshll.u32 [#allocation2], 4
      %s19 = int_to_ptr.vmem [resolvable:$true] %s18
      %24 = dma.hbm_to_vmem [thread:$0]  %s17, 256, %s19, [#allocation3], 128, 128, 8
    $region5: #{tpu_custom_call.1} parent=1 // pred_fallthru
      _
    // Predicated region
    $region6: #{tpu_custom_call.1} parent=1 // pred_check
      _
    $region7: #{tpu_custom_call.1} parent=1 // pred_check_branch
      %26 = sbr.rel (0) target = $region9
    $region8: #{tpu_custom_call.1} parent=1 // pred_region
      %28 = vsyncadd [#allocation6], 0
      %s29 = sshll.u32 %s1, 4
      %s30 = int_to_ptr.hbm [resolvable:$true] %s29
      %s31 = sshll.u32 [#allocation5], 4
      %s32 = int_to_ptr.vmem [resolvable:$true] %s31
      %37 = dma.hbm_to_vmem [thread:$0]  %s30, 256, %s32, [#allocation6], 128, 128, 8
    $region9: #{tpu_custom_call.1} parent=1 // pred_fallthru
      _
    // Predicated region
    $region10: #{tpu_custom_call.1} parent=1 // pred_check
      _
    $region11: #{tpu_custom_call.1} parent=1 // pred_check_branch
      %39 = sbr.rel (0) target = $region13
    $region12: #{tpu_custom_call.1} parent=1 // pred_region
      %41 = vsyncadd [#allocation6], 0
      %s42 = sshll.u32 %s2, 4
      %s43 = int_to_ptr.hbm [resolvable:$true] %s42
      %s44 = sshll.u32 [#allocation7], 4
      %s45 = int_to_ptr.vmem [resolvable:$true] %s44
      %50 = dma.hbm_to_vmem [thread:$0]  %s43, 2048, %s45, [#allocation6], 128, 128, 8
    $region13: #{tpu_custom_call.1} parent=1 // pred_fallthru
      _
    // Predicated region
    $region14: #{tpu_custom_call.1} parent=1 // pred_check
      _
    $region15: #{tpu_custom_call.1} parent=1 // pred_check_branch
      %52 = sbr.rel (0) target = $region17
    $region16: #{tpu_custom_call.1} parent=1 // pred_region
      _
    $region17: #{tpu_custom_call.1} parent=1 // pred_fallthru
      _
    // Predicated region
    $region18: #{tpu_custom_call.1} parent=1 // pred_check
      _
    $region19: #{tpu_custom_call.1} parent=1 // pred_check_branch
      %54 = sbr.rel (0) target = $region21
    $region20: #{tpu_custom_call.1} parent=1 // pred_region
      %56 = dma.done [#allocation3], 256
    $region21: #{tpu_custom_call.1} parent=1 // pred_fallthru
      _
    // Predicated region
    $region22: #{tpu_custom_call.1} parent=1 // pred_check
      _
    $region23: #{tpu_custom_call.1} parent=1 // pred_check_branch
      %58 = sbr.rel (0) target = $region25
    $region24: #{tpu_custom_call.1} parent=1 // pred_region
      %60 = dma.done [#allocation6], 256
    $region25: #{tpu_custom_call.1} parent=1 // pred_fallthru
      _
    // Predicated region
    $region26: #{tpu_custom_call.1} parent=1 // pred_check
      _
    $region27: #{tpu_custom_call.1} parent=1 // pred_check_branch
      %62 = sbr.rel (0) target = $region29
    $region28: #{tpu_custom_call.1} parent=1 // pred_region
      %64 = dma.done [#allocation6], 2048
    $region29: #{tpu_custom_call.1} parent=1 // pred_fallthru
      _
    %v65 = vld [vmem:[#allocation2] sm:$0xff]
    %v66 = vld [vmem:[#allocation2 + $0x8] sm:$0xff]
    %v67 = vld [vmem:[#allocation7] sm:$0xff]
    %v68 = vld [vmem:[#allocation7 + $0x8] sm:$0xff]
    %v69 = vld [vmem:[#allocation7 + $0x10] sm:$0xff]
    %v70 = vld [vmem:[#allocation7 + $0x18] sm:$0xff]
    %v71 = vld [vmem:[#allocation7 + $0x20] sm:$0xff]
    %v72 = vld [vmem:[#allocation7 + $0x28] sm:$0xff]
    %v73 = vld [vmem:[#allocation7 + $0x30] sm:$0xff]
    %v74 = vld [vmem:[#allocation7 + $0x38] sm:$0xff]
    %v75 = vld [vmem:[#allocation7 + $0x40] sm:$0xff]
    %v76 = vld [vmem:[#allocation7 + $0x48] sm:$0xff]
    %v77 = vld [vmem:[#allocation7 + $0x50] sm:$0xff]
    %v78 = vld [vmem:[#allocation7 + $0x58] sm:$0xff]
    %v79 = vld [vmem:[#allocation7 + $0x60] sm:$0xff]
    %v80 = vld [vmem:[#allocation7 + $0x68] sm:$0xff]
    %v81 = vld [vmem:[#allocation7 + $0x70] sm:$0xff]
    %v82 = vld [vmem:[#allocation7 + $0x78] sm:$0xff]
    %v83 = vld [vmem:[%s3] sm:$0x1]
    %v85 = vperm.slane %v83, 0
    %87 = vmatpush.msra.mxu0 %v82
    %88 = vmatpush.msra.mxu0 %v81
    %89 = vmatpush.msra.mxu0 %v80
    %90 = vmatpush.msra.mxu0 %v79
    %91 = vmatpush.msra.mxu0 %v78
    %92 = vmatpush.msra.mxu0 %v77
    %93 = vmatpush.msra.mxu0 %v76
    %94 = vmatpush.msra.mxu0 %v75
    %95 = vmatpush.msra.mxu0 %v74
    %96 = vmatpush.msra.mxu0 %v73
    %97 = vmatpush.msra.mxu0 %v72
    %98 = vmatpush.msra.mxu0 %v71
    %99 = vmatpush.msra.mxu0 %v70
    %100 = vmatpush.msra.mxu0 %v69
    %101 = vmatpush.msra.mxu0 %v68
    %102 = vmatpush.msra.mxu0 %v67
    %103 = vmatmul.f32.gmra.mxu0 %v65
    %v104 = vpop.f32.mrf.mxu0
    %v105 = vadd.f32 %v85, %v104
    %106 = vmatmul.f32.gmra.mxu0 %v66
    %v107 = vpop.f32.mrf.mxu0
    %v108 = vadd.f32 %v85, %v107
    %109 = vdwg.mxu0
    %v110 = vld [vmem:[#allocation5] sm:$0xff]
    %v111 = vld [vmem:[#allocation5 + $0x8] sm:$0xff]
    %v112 = vadd.f32 %v105, %v110
    %v113 = vadd.f32 %v108, %v111
    %114 = vst [vmem:[#allocation8] sm:$0xff] %v112
    %115 = vst [vmem:[#allocation8 + $0x8] sm:$0xff] %v113
    // Predicated region
    $region30: #{tpu_custom_call.1} parent=1 // pred_check
      _
    $region31: #{tpu_custom_call.1} parent=1 // pred_check_branch
      %117 = sbr.rel (0) target = $region33
    $region32: #{tpu_custom_call.1} parent=1 // pred_region
      %119 = vsyncadd [#allocation4], 0
      %s120 = sshll.u32 [#allocation8], 4
      %s121 = int_to_ptr.vmem [resolvable:$true] %s120
      %s122 = sshll.u32 %s4, 4
      %s123 = int_to_ptr.hbm [resolvable:$true] %s122
      %128 = dma.vmem_to_hbm [thread:$0]  %s121, 256, %s123, [#allocation4], 128, 128, 8
    $region33: #{tpu_custom_call.1} parent=1 // pred_fallthru
      _
    // Predicated region
    $region34: #{tpu_custom_call.1} parent=1 // pred_check
      _
    $region35: #{tpu_custom_call.1} parent=1 // pred_check_branch
      %130 = sbr.rel (0) target = $region37
    $region36: #{tpu_custom_call.1} parent=1 // pred_region
      %132 = dma.done [#allocation4], 256
    $region37: #{tpu_custom_call.1} parent=1 // pred_fallthru
      _
    %133 = vsyncpa [#allocation3], 1
    %134 = vsyncpa [#allocation6], 1
    %135 = vsyncpa [#allocation4], 1

</llo_original>
